<compile_context>
chip_gen: v5e
topology: v5e:2x2
jax: 0.10.0
libtpu: 0.0.40
codegen_flags: <defaults>
</compile_context>

<pallas_src>
import functools

import jax
import jax.numpy as jnp
from jax import lax
from jax.experimental import pallas as pl
from jax.experimental.pallas import tpu as pltpu

DROPOUT_P = 0.5
KEEP_PROB = 1.0 - DROPOUT_P
# Keep an element iff hash(u32) < KEEP_PROB * 2^32  (integer threshold compare).
_KEEP_THRESHOLD = min(int(KEEP_PROB * 4294967296.0), 0xFFFFFFFF)


def _dropout_linear_kernel(seed_ref, x_ref, w_ref, b_ref, o_ref):
    # ---- Linear: y = x @ W^T + b  (W kept in PyTorch [out, in] layout). ----
    y = lax.dot_general(
        x_ref[...], w_ref[...],
        dimension_numbers=(((1,), (1,)), ((), ())),   # contract last dims -> A @ B^T
        preferred_element_type=jnp.float32,
    )
    y = y + b_ref[...]                                # (1, N) broadcasts over rows

    # ---- Dropout (training): counter-based hash -> Bernoulli(keep) mask. ----
    tm, n = o_ref.shape
    row_off = (pl.program_id(0) * tm).astype(jnp.uint32)
    rows = lax.broadcasted_iota(jnp.int32, (tm, n), 0).astype(jnp.uint32) + row_off
    cols = lax.broadcasted_iota(jnp.int32, (tm, n), 1).astype(jnp.uint32)

    h = rows * jnp.uint32(0x9E3779B1) + cols * jnp.uint32(0x85EBCA77)
    h = h + seed_ref[0].astype(jnp.uint32)
    # murmur3 finalizer (good avalanche; pure VPU integer ops)
    h = h ^ (h >> 16)
    h = h * jnp.uint32(0x85EBCA6B)
    h = h ^ (h >> 13)
    h = h * jnp.uint32(0xC2B2AE35)
    h = h ^ (h >> 16)

    keep = h < jnp.uint32(_KEEP_THRESHOLD)
    o_ref[...] = jnp.where(keep, y * (1.0 / KEEP_PROB), 0.0).astype(o_ref.dtype)


@functools.partial(jax.jit, static_argnames=("block_m",))
def dropout_wrap_forward(x, w, b, seed, *, block_m=512):
    """DropoutWrap(nn.Linear) forward.

    x: [B, S, H_in] f32, w: [H_out, H_in] (PyTorch layout), b: [H_out],
    seed: int32 scalar (dropout RNG seed).
    """
    B, S, K = x.shape
    N = w.shape[0]
    M = B * S

    x2d = x.reshape(M, K)
    b2d = b.reshape(1, N)
    seed_arr = jnp.asarray([seed], dtype=jnp.int32)

    tm = min(block_m, M)            # row tile; block_m should be a multiple of 8
    grid_m = pl.cdiv(M, tm)

    out2d = pl.pallas_call(
        _dropout_linear_kernel,
        out_shape=jax.ShapeDtypeStruct((M, N), x.dtype),
        grid=(grid_m,),
        in_specs=[
            pl.BlockSpec(memory_space=pltpu.SMEM),          # seed (scalar, SMEM)
            pl.BlockSpec((tm, K), lambda i: (i, 0)),        # x row-tile (pipelined)
            pl.BlockSpec((N, K), lambda i: (0, 0)),         # W resident across grid
            pl.BlockSpec((1, N), lambda i: (0, 0)),         # bias resident
        ],
        out_specs=pl.BlockSpec((tm, N), lambda i: (i, 0)),  # lane-dense out tile
        compiler_params=pltpu.CompilerParams(
            dimension_semantics=("parallel",),
            vmem_limit_bytes=32 * 1024 * 1024,
        ),
    )(seed_arr, x2d, w, b2d)

    return out2d.reshape(B, S, N)


if __name__ == "__main__":
    # Small but MXU/lane-aligned demo shape: hidden is a multiple of 128.
    B, S, H = 2, 128, 128

    key = jax.random.PRNGKey(0)
    kx, kw, kb = jax.random.split(key, 3)
    x = jax.random.normal(kx, (B, S, H), dtype=jnp.float32)
    # Deterministic PyTorch-style Linear params: weight [out, in], bias [out].
    w = jax.random.normal(kw, (H, H), dtype=jnp.float32) * (1.0 / jnp.sqrt(H))
    b = jax.random.normal(kb, (H,), dtype=jnp.float32) * 0.01

    # block_m=128 -> grid of 2 steps (exercises the pipeline + per-tile masks).
    out = dropout_wrap_forward(x, w, b, 1234, block_m=128)
    jax.block_until_ready(out)

    assert out.shape == (B, S, H) and out.dtype == jnp.float32

    # Reference linear (no dropout): kept entries must equal (x @ W^T + b) / keep_prob.
    ref = (x.reshape(-1, H) @ w.T + b).reshape(B, S, H)
    kept = out != 0.0
    max_err = float(jnp.max(jnp.abs(jnp.where(kept, out - ref / KEEP_PROB, 0.0))))
    zero_frac = float(jnp.mean(out == 0.0))
    assert 0.35 < zero_frac < 0.65, f"unexpected dropout zero fraction {zero_frac}"
    assert max_err < 5e-2, f"kept values mismatch vs reference, max_err={max_err}"

    print("KERNEL_OK")
</pallas_src>

<mosaic_0001>
module attributes {stable_mosaic.version = 11 : i64} {
  func.func @_dropout_linear_kernel(%arg0: i32, %arg1: memref<1xi32, #tpu.memory_space<smem>>, %arg2: memref<128x128xf32, #tpu.memory_space<vmem>>, %arg3: memref<128x128xf32, #tpu.memory_space<vmem>>, %arg4: memref<1x128xf32, #tpu.memory_space<vmem>>, %arg5: memref<128x128xf32, #tpu.memory_space<vmem>>) attributes {dimension_semantics = [#tpu.dimension_semantics<parallel>], iteration_bounds = array<i64: 2>, scalar_prefetch = 0 : i64, scratch_operands = 0 : i64, tpu.core_type = #tpu.core_type<tc>, window_params = [{transform_indices = @transform_0, window_bounds = array<i64: 1>}, {transform_indices = @transform_1, window_bounds = array<i64: 128, 128>}, {pipeline_mode = #tpu.pipeline_mode<synchronous>, transform_indices = @transform_2, window_bounds = array<i64: 128, 128>}, {pipeline_mode = #tpu.pipeline_mode<synchronous>, transform_indices = @transform_3, window_bounds = array<i64: 1, 128>}, {transform_indices = @transform_4, window_bounds = array<i64: 128, 128>}]} {
    %c0 = arith.constant 0 : index
    %c0_0 = arith.constant 0 : index
    %0 = vector.load %arg2[%c0, %c0_0] : memref<128x128xf32, #tpu.memory_space<vmem>>, vector<128x128xf32>
    %c0_1 = arith.constant 0 : index
    %c0_2 = arith.constant 0 : index
    %1 = vector.load %arg3[%c0_1, %c0_2] : memref<128x128xf32, #tpu.memory_space<vmem>>, vector<128x128xf32>
    %cst = arith.constant dense<0.000000e+00> : vector<128x128xf32>
    %2 = tpu.matmul %0, %1, %cst {dimension_numbers = #tpu.dot_dimension_numbers<[1], [1], [0], [0], [0, 0, 1, 0], [], []>} : vector<128x128xf32>, vector<128x128xf32>, vector<128x128xf32> -> vector<128x128xf32>
    %c0_3 = arith.constant 0 : index
    %c0_4 = arith.constant 0 : index
    %3 = vector.load %arg4[%c0_3, %c0_4] : memref<1x128xf32, #tpu.memory_space<vmem>>, vector<1x128xf32>
    %4 = vector.broadcast %3 : vector<1x128xf32> to vector<128x128xf32>
    %5 = arith.addf %2, %4 : vector<128x128xf32>
    %c128_i32 = arith.constant 128 : i32
    %6 = arith.muli %arg0, %c128_i32 : i32
    %7 = tpu.iota {dimensions = array<i32: 0>} : vector<128x128xi32>
    %8 = vector.broadcast %6 : i32 to vector<128x128xi32>
    %9 = arith.addi %7, %8 : vector<128x128xi32>
    %10 = tpu.iota {dimensions = array<i32: 1>} : vector<128x128xi32>
    %c-1640531535_i32 = arith.constant -1640531535 : i32
    %11 = vector.broadcast %c-1640531535_i32 : i32 to vector<128x128xi32>
    %12 = arith.muli %9, %11 : vector<128x128xi32>
    %c-2048144777_i32 = arith.constant -2048144777 : i32
    %13 = vector.broadcast %c-2048144777_i32 : i32 to vector<128x128xi32>
    %14 = arith.muli %10, %13 : vector<128x128xi32>
    %15 = arith.addi %12, %14 : vector<128x128xi32>
    %c0_5 = arith.constant 0 : index
    %16 = memref.load %arg1[%c0_5] : memref<1xi32, #tpu.memory_space<smem>>
    %17 = vector.broadcast %16 : i32 to vector<128x128xi32>
    %18 = arith.addi %15, %17 : vector<128x128xi32>
    %c16_i32 = arith.constant 16 : i32
    %19 = vector.broadcast %c16_i32 : i32 to vector<128x128xi32>
    %20 = arith.shrui %18, %19 : vector<128x128xi32>
    %21 = arith.xori %18, %20 : vector<128x128xi32>
    %c-2048144789_i32 = arith.constant -2048144789 : i32
    %22 = vector.broadcast %c-2048144789_i32 : i32 to vector<128x128xi32>
    %23 = arith.muli %21, %22 : vector<128x128xi32>
    %c13_i32 = arith.constant 13 : i32
    %24 = vector.broadcast %c13_i32 : i32 to vector<128x128xi32>
    %25 = arith.shrui %23, %24 : vector<128x128xi32>
    %26 = arith.xori %23, %25 : vector<128x128xi32>
    %c-1028477387_i32 = arith.constant -1028477387 : i32
    %27 = vector.broadcast %c-1028477387_i32 : i32 to vector<128x128xi32>
    %28 = arith.muli %26, %27 : vector<128x128xi32>
    %c16_i32_6 = arith.constant 16 : i32
    %29 = vector.broadcast %c16_i32_6 : i32 to vector<128x128xi32>
    %30 = arith.shrui %28, %29 : vector<128x128xi32>
    %31 = arith.xori %28, %30 : vector<128x128xi32>
    %c-2147483648_i32 = arith.constant -2147483648 : i32
    %32 = vector.broadcast %c-2147483648_i32 : i32 to vector<128x128xi32>
    %33 = arith.cmpi ult, %31, %32 : vector<128x128xi32>
    %cst_7 = arith.constant 2.000000e+00 : f32
    %34 = vector.broadcast %cst_7 : f32 to vector<128x128xf32>
    %35 = arith.mulf %5, %34 : vector<128x128xf32>
    %cst_8 = arith.constant 0.000000e+00 : f32
    %36 = vector.broadcast %cst_8 : f32 to vector<128x128xf32>
    %37 = arith.select %33, %35, %36 : vector<128x128xi1>, vector<128x128xf32>
    %c0_9 = arith.constant 0 : index
    %c0_10 = arith.constant 0 : index
    %38 = vector.load %arg5[%c0_9, %c0_10] : memref<128x128xf32, #tpu.memory_space<vmem>>, vector<128x128xf32>
    tpu.vector_store %arg5[%c0_9, %c0_10], %37 {strides = array<i32>} : memref<128x128xf32, #tpu.memory_space<vmem>>, vector<128x128xf32>,
    return
  }
  func.func @transform_0(%arg0: i32) -> i32 {
    %c0_i32 = arith.constant 0 : i32
    %c0_i32_0 = arith.constant 0 : i32
    return %c0_i32 : i32
  }
  func.func @transform_1(%arg0: i32) -> (i32, i32) {
    %c0_i32 = arith.constant 0 : i32
    %c0_i32_0 = arith.constant 0 : i32
    return %arg0, %c0_i32 : i32, i32
  }
  func.func @transform_2(%arg0: i32) -> (i32, i32) {
    %c0_i32 = arith.constant 0 : i32
    %c0_i32_0 = arith.constant 0 : i32
    %c0_i32_1 = arith.constant 0 : i32
    return %c0_i32, %c0_i32_0 : i32, i32
  }
  func.func @transform_3(%arg0: i32) -> (i32, i32) {
    %c0_i32 = arith.constant 0 : i32
    %c0_i32_0 = arith.constant 0 : i32
    %c0_i32_1 = arith.constant 0 : i32
    return %c0_i32, %c0_i32_0 : i32, i32
  }
  func.func @transform_4(%arg0: i32) -> (i32, i32) {
    %c0_i32 = arith.constant 0 : i32
    %c0_i32_0 = arith.constant 0 : i32
    return %arg0, %c0_i32 : i32, i32
  }
}

</mosaic_0001>

<llo_original>
// kernel: dropout_wrap_forward.1
$region0: #{dropout_wrap_forward.1}
  #allocation0 [shape = 'u32[]', space=smem, size = 0x4, offset = 0x4, fixed_abs, tag = 'smem constant byte address 0x4 - core index']
  #allocation1 [shape = 'u32[72,128]{1,0:T(1,128)}', space=vmem, size = 0x9000, scoped, tag = 'internal scratch']
  #allocation2 [shape = 's32[1]{0:T(128)S(6)}', space=smem, size = 0x200, scoped, tag = 'scoped memory for dropout_wrap_forward.1']
  %s0 = inlined_call_operand.<no memory space> [shape: s32[1], index: 0, kind: input, shape index: {}]
  %s1 = inlined_call_operand.hbm [shape: f32[256,128], index: 1, kind: input, shape index: {}]
  %s2 = inlined_call_operand.hbm [shape: f32[128,128], index: 2, kind: input, shape index: {}]
  %s3 = inlined_call_operand.vmem [shape: f32[1,128], index: 3, kind: input, shape index: {}]
  %s4 = inlined_call_operand.hbm [shape: f32[256,128], index: 4, kind: output, shape index: {}]
  %s5 = sld [smem:[#allocation0]]
  $region57: #{dropout_wrap_forward.1} parent=0
    _
  %s7 = ssub.s32 1, %s5
  %s8 = scalar_select 0, %s7, %s5
  %9 = sst [smem:[#allocation2]] %s0
  $region1: #{dropout_wrap_forward.1} parent=0
    #allocation3 [shape = 'u8[131072]{0}', space=vmem, size = 0x20000, scoped, tag = 'input window, operand 1']
    #allocation4 [shape = 's32[2]{0}', space=sflag, size = 0x8, scoped, tag = 'scoped memory for dropout_wrap_forward.1']
    #allocation5 [shape = 's32[2]{0}', space=sflag, size = 0x8, scoped, tag = 'scoped memory for dropout_wrap_forward.1']
    #allocation6 [shape = 'u8[65536]{0}', space=vmem, size = 0x10000, scoped, tag = 'input window, operand 2, single buffered']
    #allocation7 [shape = 's32[1]{0}', space=sflag, size = 0x4, scoped, tag = 'scoped memory for dropout_wrap_forward.1']
    #allocation8 [shape = 'u8[131072]{0}', space=vmem, size = 0x20000, scoped, tag = 'output window, operand 0']
    %10 = vsyncpa [#allocation4], 0
    %s11 = scalar_lea.sflag [#allocation4], 1
    %12 = vsyncpa %s11, 0
    %13 = vsyncpa [#allocation7], 0
    %14 = vsyncpa [#allocation5], 0
    %s15 = scalar_lea.sflag [#allocation5], 1
    %16 = vsyncpa %s15, 0
    loop: start=0, step=1, limit=4
    $region2: #{dropout_wrap_forward.1} parent=1 // loop_pre_header
      _
    $region3: #{dropout_wrap_forward.1} parent=1 // loop_header
      %s18 = sphi 0, %s22
      %p19 = scmp.ge.s32.totalorder %s18, 4
      %s26 = sphi 0, %s26
      %s28 = sphi 0, %s26
      %s29 = sphi 0, %s28
      %s43 = sphi 0, %s29
      %s49 = sphi 0, %s51
      %s52 = sphi 0, %s49
      %s53 = sphi 0, %s52
      %s69 = sphi 0, %s53
      %s73 = sphi 0, %s73
      %s75 = sphi 0, %s73
      %s76 = sphi 0, %s75
      %s90 = sphi 0, %s76
      %s94 = sphi 0, %s94
      %s96 = sphi 0, %s94
      %s97 = sphi 0, %s96
      %s111 = sphi 0, %s97
      %s117 = sphi 0, %s119
      %s120 = sphi 0, %s117
      %s121 = sphi 0, %s120
      %s137 = sphi 0, %s121
    $region4: #{dropout_wrap_forward.1} parent=1 // loop_header_branch
      %21 = sbr.rel (%p19) target = $region8
    $region5: #{dropout_wrap_forward.1} parent=1 // loop_body
      %s23 = ssub.s32 %s18, 1
      %s24 = ssub.s32 %s18, 2
      %s25 = sadd.s32 %s18, 1
      %s27 = sadd.s32 %s26, 1
      %p30 = scmp.eq.s32.totalorder %s18, 1
      %p31 = scmp.ne.s32.totalorder %s26, %s28
      %p32 = scmp.eq.s32.totalorder %s18, 0
      %p33 = por %p31, %p32
      %p34 = scmp.ne.s32.totalorder %s26, %s28
      %p35 = scmp.eq.s32.totalorder %s23, 1
      %p36 = por %p34, %p35
      %p37 = scmp.ne.s32.totalorder %s28, %s29
      %p38 = scmp.eq.s32.totalorder %s23, 0
      %p39 = por %p37, %p38
      %p40 = scmp.ne.s32.totalorder %s28, %s29
      %p41 = scmp.eq.s32.totalorder %s24, 1
      %p42 = por %p40, %p41
      %p44 = scmp.ne.s32.totalorder %s29, %s43
      %p45 = scmp.eq.s32.totalorder %s24, 0
      %p46 = por %p44, %p45
      %s47 = ssub.s32 %s18, %s25
      %p48 = scmp.eq.s32.totalorder %s47, 0
      %s50 = sadd.s32 %s49, 1
      %s51 = scalar_select %p48, %s49, %s50
      %p54 = pneg %p48
      %p55 = scmp.eq.s32.totalorder %s18, 1
      %p56 = por %p54, %p55
      %p57 = scmp.ne.s32.totalorder %s49, %s52
      %p58 = scmp.eq.s32.totalorder %s18, 0
      %p59 = por %p57, %p58
      %p60 = scmp.ne.s32.totalorder %s49, %s52
      %p61 = scmp.eq.s32.totalorder %s23, 1
      %p62 = por %p60, %p61
      %p63 = scmp.ne.s32.totalorder %s52, %s53
      %p64 = scmp.eq.s32.totalorder %s23, 0
      %p65 = por %p63, %p64
      %p66 = scmp.ne.s32.totalorder %s52, %s53
      %p67 = scmp.eq.s32.totalorder %s24, 1
      %p68 = por %p66, %p67
      %p70 = scmp.ne.s32.totalorder %s53, %s69
      %p71 = scmp.eq.s32.totalorder %s24, 0
      %p72 = por %p70, %p71
      %s74 = sadd.s32 %s73, 1
      %p77 = scmp.eq.s32.totalorder %s18, 1
      %p78 = scmp.ne.s32.totalorder %s73, %s75
      %p79 = scmp.eq.s32.totalorder %s18, 0
      %p80 = por %p78, %p79
      %p81 = scmp.ne.s32.totalorder %s73, %s75
      %p82 = scmp.eq.s32.totalorder %s23, 1
      %p83 = por %p81, %p82
      %p84 = scmp.ne.s32.totalorder %s75, %s76
      %p85 = scmp.eq.s32.totalorder %s23, 0
      %p86 = por %p84, %p85
      %p87 = scmp.ne.s32.totalorder %s75, %s76
      %p88 = scmp.eq.s32.totalorder %s24, 1
      %p89 = por %p87, %p88
      %p91 = scmp.ne.s32.totalorder %s76, %s90
      %p92 = scmp.eq.s32.totalorder %s24, 0
      %p93 = por %p91, %p92
      %s95 = sadd.s32 %s94, 1
      %p98 = scmp.eq.s32.totalorder %s18, 1
      %p99 = scmp.ne.s32.totalorder %s94, %s96
      %p100 = scmp.eq.s32.totalorder %s18, 0
      %p101 = por %p99, %p100
      %p102 = scmp.ne.s32.totalorder %s94, %s96
      %p103 = scmp.eq.s32.totalorder %s23, 1
      %p104 = por %p102, %p103
      %p105 = scmp.ne.s32.totalorder %s96, %s97
      %p106 = scmp.eq.s32.totalorder %s23, 0
      %p107 = por %p105, %p106
      %p108 = scmp.ne.s32.totalorder %s96, %s97
      %p109 = scmp.eq.s32.totalorder %s24, 1
      %p110 = por %p108, %p109
      %p112 = scmp.ne.s32.totalorder %s97, %s111
      %p113 = scmp.eq.s32.totalorder %s24, 0
      %p114 = por %p112, %p113
      %s115 = ssub.s32 %s18, %s25
      %p116 = scmp.eq.s32.totalorder %s115, 0
      %s118 = sadd.s32 %s117, 1
      %s119 = scalar_select %p116, %s117, %s118
      %p122 = pneg %p116
      %p123 = scmp.eq.s32.totalorder %s18, 1
      %p124 = por %p122, %p123
      %p125 = scmp.ne.s32.totalorder %s117, %s120
      %p126 = scmp.eq.s32.totalorder %s18, 0
      %p127 = por %p125, %p126
      %p128 = scmp.ne.s32.totalorder %s117, %s120
      %p129 = scmp.eq.s32.totalorder %s23, 1
      %p130 = por %p128, %p129
      %p131 = scmp.ne.s32.totalorder %s120, %s121
      %p132 = scmp.eq.s32.totalorder %s23, 0
      %p133 = por %p131, %p132
      %p134 = scmp.ne.s32.totalorder %s120, %s121
      %p135 = scmp.eq.s32.totalorder %s24, 1
      %p136 = por %p134, %p135
      %p138 = scmp.ne.s32.totalorder %s121, %s137
      %p139 = scmp.eq.s32.totalorder %s24, 0
      %p140 = por %p138, %p139
      %p141 = scmp.le.s32.totalorder 1, %s18
      %p142 = scmp.lt.s32.totalorder %s18, 3
      %p143 = pnand %p141, %p142
      %p144 = pneg %p143
      // Predicated region
      $region9: #{dropout_wrap_forward.1} parent=5 // pred_check
        _
      $region10: #{dropout_wrap_forward.1} parent=5 // pred_check_branch
        %146 = sbr.rel (%p143) target = $region12
      $region11: #{dropout_wrap_forward.1} parent=5 // pred_region
        %s147 = ssub.s32 %s18, 1
        // Predicated region
        $region13: #{dropout_wrap_forward.1} parent=11 // pred_check
          %p148 = pneg %p39
        $region14: #{dropout_wrap_forward.1} parent=11 // pred_check_branch
          %150 = sbr.rel (%p148) target = $region16
        $region15: #{dropout_wrap_forward.1} parent=11 // pred_region
          _
        $region16: #{dropout_wrap_forward.1} parent=11 // pred_fallthru
          _
        // Predicated region
        $region17: #{dropout_wrap_forward.1} parent=11 // pred_check
          %p151 = pneg %p86
        $region18: #{dropout_wrap_forward.1} parent=11 // pred_check_branch
          %153 = sbr.rel (%p151) target = $region20
        $region19: #{dropout_wrap_forward.1} parent=11 // pred_region
          %155 = vsyncadd [#allocation7], 0
          %s156 = sshll.u32 %s2, 4
          %s157 = int_to_ptr.hbm [resolvable:$true] %s156
          %s158 = sshll.u32 [#allocation6], 4
          %s159 = int_to_ptr.vmem [resolvable:$true] %s158
          %164 = dma.hbm_to_vmem [thread:$0]  %s157, 2048, %s159, [#allocation7], 128, 128, 8
        $region20: #{dropout_wrap_forward.1} parent=11 // pred_fallthru
          _
        // Predicated region
        $region21: #{dropout_wrap_forward.1} parent=11 // pred_check
          %p165 = pneg %p107
        $region22: #{dropout_wrap_forward.1} parent=11 // pred_check_branch
          %167 = sbr.rel (%p165) target = $region24
        $region23: #{dropout_wrap_forward.1} parent=11 // pred_region
          _
        $region24: #{dropout_wrap_forward.1} parent=11 // pred_fallthru
          _
      $region12: #{dropout_wrap_forward.1} parent=5 // pred_fallthru
        _
      %p168 = scmp.lt.s32.totalorder %s18, 2
      // Predicated region
      $region25: #{dropout_wrap_forward.1} parent=5 // pred_check
        %p169 = pneg %p168
      $region26: #{dropout_wrap_forward.1} parent=5 // pred_check_branch
        %171 = sbr.rel (%p169) target = $region28
      $region27: #{dropout_wrap_forward.1} parent=5 // pred_region
        // Predicated region
        $region29: #{dropout_wrap_forward.1} parent=27 // pred_check
          %p172 = pneg %p59
        $region30: #{dropout_wrap_forward.1} parent=27 // pred_check_branch
          %174 = sbr.rel (%p172) target = $region32
        $region31: #{dropout_wrap_forward.1} parent=27 // pred_region
          %s175 = sand.u32 %s49, 1
          %s176 = scalar_lea.sflag [#allocation4], %s175
          %s177 = sand.u32 %s49, 1
          %s178 = smul.addr %s177, 128
          %s179 = scalar_lea.vmem [#allocation3], %s178
          %s180 = smul.u32 16, %s18
          %182 = vsyncadd %s176, 0
          %s183 = smul.addr %s180, 8
          %s184 = scalar_lea.hbm %s1, %s183
          %s185 = sshll.u32 %s184, 4
          %s186 = int_to_ptr.hbm [resolvable:$true] %s185
          %s187 = sshll.u32 %s179, 4
          %s188 = int_to_ptr.vmem [resolvable:$true] %s187
          %193 = dma.hbm_to_vmem [thread:$0]  %s186, 2048, %s188, %s176, 128, 128, 8
        $region32: #{dropout_wrap_forward.1} parent=27 // pred_fallthru
          _
      $region28: #{dropout_wrap_forward.1} parent=5 // pred_fallthru
        _
      %p194 = scmp.le.s32.totalorder 1, %s18
      %p195 = scmp.lt.s32.totalorder %s18, 3
      %p196 = pnand %p194, %p195
      %p197 = pneg %p196
      // Predicated region
      $region33: #{dropout_wrap_forward.1} parent=5 // pred_check
        _
      $region34: #{dropout_wrap_forward.1} parent=5 // pred_check_branch
        %199 = sbr.rel (%p196) target = $region36
      $region35: #{dropout_wrap_forward.1} parent=5 // pred_region
        %s200 = ssub.s32 %s18, 1
        %s201 = sand.u32 %s52, 1
        %s202 = scalar_lea.sflag [#allocation4], %s201
        %s203 = sand.u32 %s52, 1
        %s204 = smul.addr %s203, 128
        %s205 = scalar_lea.vmem [#allocation3], %s204
        // Predicated region
        $region37: #{dropout_wrap_forward.1} parent=35 // pred_check
          %p206 = pneg %p65
        $region38: #{dropout_wrap_forward.1} parent=35 // pred_check_branch
          %208 = sbr.rel (%p206) target = $region40
        $region39: #{dropout_wrap_forward.1} parent=35 // pred_region
          %210 = dma.done %s202, 2048
        $region40: #{dropout_wrap_forward.1} parent=35 // pred_fallthru
          _
        // Predicated region
        $region41: #{dropout_wrap_forward.1} parent=35 // pred_check
          %p211 = pneg %p86
        $region42: #{dropout_wrap_forward.1} parent=35 // pred_check_branch
          %213 = sbr.rel (%p211) target = $region44
        $region43: #{dropout_wrap_forward.1} parent=35 // pred_region
          %215 = dma.done [#allocation7], 2048
        $region44: #{dropout_wrap_forward.1} parent=35 // pred_fallthru
          _
        %p216 = pneg %p39
        %p217 = pneg %p36
        %s218 = sand.u32 %s52, 1
        %s219 = scalar_lea.sflag [#allocation4], %s218
        %s220 = sand.u32 %s52, 1
        %s221 = smul.addr %s220, 128
        %s222 = scalar_lea.vmem [#allocation3], %s221
        %p223 = pneg %p65
        %p224 = pneg %p62
        %p225 = pneg %p86
        %p226 = pneg %p83
        %p227 = pneg %p107
        %p228 = pneg %p104
        %p229 = pneg %p133
        %p230 = pneg %p130
        %s231 = sand.u32 %s120, 1
        %s232 = scalar_lea.sflag [#allocation5], %s231
        %s233 = sand.u32 %s120, 1
        %s234 = smul.addr %s233, 128
        %s235 = scalar_lea.vmem [#allocation8], %s234
        %s236 = smul.u32 16, %s23
        %s237 = smul.u32 16, %s23
        %v238 = vld [vmem:[%s205] sm:$0xff]
        %v239 = vld [vmem:[%s205 + $0x8] sm:$0xff]
        %v240 = vld [vmem:[%s205 + $0x10] sm:$0xff]
        %v241 = vld [vmem:[%s205 + $0x18] sm:$0xff]
        %v242 = vld [vmem:[%s205 + $0x20] sm:$0xff]
        %v243 = vld [vmem:[%s205 + $0x28] sm:$0xff]
        %v244 = vld [vmem:[%s205 + $0x30] sm:$0xff]
        %v245 = vld [vmem:[%s205 + $0x38] sm:$0xff]
        %v246 = vld [vmem:[%s205 + $0x40] sm:$0xff]
        %v247 = vld [vmem:[%s205 + $0x48] sm:$0xff]
        %v248 = vld [vmem:[%s205 + $0x50] sm:$0xff]
        %v249 = vld [vmem:[%s205 + $0x58] sm:$0xff]
        %v250 = vld [vmem:[%s205 + $0x60] sm:$0xff]
        %v251 = vld [vmem:[%s205 + $0x68] sm:$0xff]
        %v252 = vld [vmem:[%s205 + $0x70] sm:$0xff]
        %v253 = vld [vmem:[%s205 + $0x78] sm:$0xff]
        %v254 = vld [vmem:[#allocation6] sm:$0xff]
        %v255 = vld [vmem:[#allocation6 + $0x8] sm:$0xff]
        %v256 = vld [vmem:[#allocation6 + $0x10] sm:$0xff]
        %v257 = vld [vmem:[#allocation6 + $0x18] sm:$0xff]
        %v258 = vld [vmem:[#allocation6 + $0x20] sm:$0xff]
        %v259 = vld [vmem:[#allocation6 + $0x28] sm:$0xff]
        %v260 = vld [vmem:[#allocation6 + $0x30] sm:$0xff]
        %v261 = vld [vmem:[#allocation6 + $0x38] sm:$0xff]
        %v262 = vld [vmem:[#allocation6 + $0x40] sm:$0xff]
        %v263 = vld [vmem:[#allocation6 + $0x48] sm:$0xff]
        %v264 = vld [vmem:[#allocation6 + $0x50] sm:$0xff]
        %v265 = vld [vmem:[#allocation6 + $0x58] sm:$0xff]
        %v266 = vld [vmem:[#allocation6 + $0x60] sm:$0xff]
        %v267 = vld [vmem:[#allocation6 + $0x68] sm:$0xff]
        %v268 = vld [vmem:[#allocation6 + $0x70] sm:$0xff]
        %v269 = vld [vmem:[#allocation6 + $0x78] sm:$0xff]
        %v270 = vld [vmem:[%s3] sm:$0x1]
        %v272 = vperm.slane %v270, 0
        %274 = vmatpush.xpose.msra.mxu0 %v269
        %275 = vmatpush.xpose.msra.mxu0 %v268
        %276 = vmatpush.xpose.msra.mxu0 %v267
        %277 = vmatpush.xpose.msra.mxu0 %v266
        %278 = vmatpush.xpose.msra.mxu0 %v265
        %279 = vmatpush.xpose.msra.mxu0 %v264
        %280 = vmatpush.xpose.msra.mxu0 %v263
        %281 = vmatpush.xpose.msra.mxu0 %v262
        %282 = vmatpush.xpose.msra.mxu0 %v261
        %283 = vmatpush.xpose.msra.mxu0 %v260
        %284 = vmatpush.xpose.msra.mxu0 %v259
        %285 = vmatpush.xpose.msra.mxu0 %v258
        %286 = vmatpush.xpose.msra.mxu0 %v257
        %287 = vmatpush.xpose.msra.mxu0 %v256
        %288 = vmatpush.xpose.msra.mxu0 %v255
        %289 = vmatpush.xpose.msra.mxu0 %v254
        %290 = vmatmul.f32.gmra.mxu0 %v238
        %v291 = vpop.f32.mrf.mxu0
        %v292 = vadd.f32 %v272, %v291
        %293 = vmatmul.f32.gmra.mxu0 %v239
        %v294 = vpop.f32.mrf.mxu0
        %v295 = vadd.f32 %v272, %v294
        %296 = vmatmul.f32.gmra.mxu0 %v240
        %v297 = vpop.f32.mrf.mxu0
        %v298 = vadd.f32 %v272, %v297
        %299 = vmatmul.f32.gmra.mxu0 %v241
        %v300 = vpop.f32.mrf.mxu0
        %v301 = vadd.f32 %v272, %v300
        %302 = vmatmul.f32.gmra.mxu0 %v242
        %v303 = vpop.f32.mrf.mxu0
        %v304 = vadd.f32 %v272, %v303
        %305 = vmatmul.f32.gmra.mxu0 %v243
        %v306 = vpop.f32.mrf.mxu0
        %v307 = vadd.f32 %v272, %v306
        %308 = vmatmul.f32.gmra.mxu0 %v244
        %v309 = vpop.f32.mrf.mxu0
        %v310 = vadd.f32 %v272, %v309
        %311 = vmatmul.f32.gmra.mxu0 %v245
        %v312 = vpop.f32.mrf.mxu0
        %v313 = vadd.f32 %v272, %v312
        %314 = vmatmul.f32.gmra.mxu0 %v246
        %v315 = vpop.f32.mrf.mxu0
        %v316 = vadd.f32 %v272, %v315
        %317 = vmatmul.f32.gmra.mxu0 %v247
        %v318 = vpop.f32.mrf.mxu0
        %v319 = vadd.f32 %v272, %v318
        %320 = vmatmul.f32.gmra.mxu0 %v248
        %v321 = vpop.f32.mrf.mxu0
        %v322 = vadd.f32 %v272, %v321
        %323 = vmatmul.f32.gmra.mxu0 %v249
        %v324 = vpop.f32.mrf.mxu0
        %v325 = vadd.f32 %v272, %v324
        %326 = vmatmul.f32.gmra.mxu0 %v250
        %v327 = vpop.f32.mrf.mxu0
        %v328 = vadd.f32 %v272, %v327
        %329 = vmatmul.f32.gmra.mxu0 %v251
        %v330 = vpop.f32.mrf.mxu0
        %v331 = vadd.f32 %v272, %v330
        %332 = vmatmul.f32.gmra.mxu0 %v252
        %v333 = vpop.f32.mrf.mxu0
        %v334 = vadd.f32 %v272, %v333
        %335 = vmatmul.f32.gmra.mxu0 %v253
        %v336 = vpop.f32.mrf.mxu0
        %v337 = vadd.f32 %v272, %v336
        %338 = vdwg.mxu0
        %s339 = smul.u32 %s23, 128
        %v340 = vlaneseq
        %v341 = vshrl.u32 %v340, 7
        %v342 = vadd.s32 %v341, 8
        %v343 = vadd.s32 %v341, 16
        %v344 = vadd.s32 %v341, 24
        %v345 = vadd.s32 %v341, 32
        %v346 = vadd.s32 %v341, 40
        %v347 = vadd.s32 %v341, 48
        %v348 = vadd.s32 %v341, 56
        %v349 = vadd.s32 %v341, 64
        %v350 = vadd.s32 %v341, 72
        %v351 = vadd.s32 %v341, 80
        %v352 = vadd.s32 %v341, 88
        %v353 = vadd.s32 %v341, 96
        %v354 = vadd.s32 %v341, 104
        %v355 = vadd.s32 %v341, 112
        %v356 = vadd.s32 %v341, 120
        %v357 = vstv %s339
        %v358 = vadd.s32 %v341, %v357
        %v359 = vadd.s32 %v342, %v357
        %v360 = vadd.s32 %v343, %v357
        %v361 = vadd.s32 %v344, %v357
        %v362 = vadd.s32 %v345, %v357
        %v363 = vadd.s32 %v346, %v357
        %v364 = vadd.s32 %v347, %v357
        %v365 = vadd.s32 %v348, %v357
        %v366 = vadd.s32 %v349, %v357
        %v367 = vadd.s32 %v350, %v357
        %v368 = vadd.s32 %v351, %v357
        %v369 = vadd.s32 %v352, %v357
        %v370 = vadd.s32 %v353, %v357
        %v371 = vadd.s32 %v354, %v357
        %v372 = vadd.s32 %v355, %v357
        %v373 = vadd.s32 %v356, %v357
        %v374 = vlaneseq
        %v375 = vand.u32 %v374, 127
        %v376 = vmul.u32 %v358, 2654435761
        %v377 = vmul.u32 %v359, 2654435761
        %v378 = vmul.u32 %v360, 2654435761
        %v379 = vmul.u32 %v361, 2654435761
        %v380 = vmul.u32 %v362, 2654435761
        %v381 = vmul.u32 %v363, 2654435761
        %v382 = vmul.u32 %v364, 2654435761
        %v383 = vmul.u32 %v365, 2654435761
        %v384 = vmul.u32 %v366, 2654435761
        %v385 = vmul.u32 %v367, 2654435761
        %v386 = vmul.u32 %v368, 2654435761
        %v387 = vmul.u32 %v369, 2654435761
        %v388 = vmul.u32 %v370, 2654435761
        %v389 = vmul.u32 %v371, 2654435761
        %v390 = vmul.u32 %v372, 2654435761
        %v391 = vmul.u32 %v373, 2654435761
        %v392 = vmul.u32 %v375, 2246822519
        %v393 = vadd.s32 %v376, %v392
        %v394 = vadd.s32 %v377, %v392
        %v395 = vadd.s32 %v378, %v392
        %v396 = vadd.s32 %v379, %v392
        %v397 = vadd.s32 %v380, %v392
        %v398 = vadd.s32 %v381, %v392
        %v399 = vadd.s32 %v382, %v392
        %v400 = vadd.s32 %v383, %v392
        %v401 = vadd.s32 %v384, %v392
        %v402 = vadd.s32 %v385, %v392
        %v403 = vadd.s32 %v386, %v392
        %v404 = vadd.s32 %v387, %v392
        %v405 = vadd.s32 %v388, %v392
        %v406 = vadd.s32 %v389, %v392
        %v407 = vadd.s32 %v390, %v392
        %v408 = vadd.s32 %v391, %v392
        %s409 = sld [smem:[#allocation2]]
        %v410 = vstv %s409
        %v411 = vadd.s32 %v393, %v410
        %v412 = vadd.s32 %v394, %v410
        %v413 = vadd.s32 %v395, %v410
        %v414 = vadd.s32 %v396, %v410
        %v415 = vadd.s32 %v397, %v410
        %v416 = vadd.s32 %v398, %v410
        %v417 = vadd.s32 %v399, %v410
        %v418 = vadd.s32 %v400, %v410
        %v419 = vadd.s32 %v401, %v410
        %v420 = vadd.s32 %v402, %v410
        %v421 = vadd.s32 %v403, %v410
        %v422 = vadd.s32 %v404, %v410
        %v423 = vadd.s32 %v405, %v410
        %v424 = vadd.s32 %v406, %v410
        %v425 = vadd.s32 %v407, %v410
        %v426 = vadd.s32 %v408, %v410
        %v427 = vshrl.u32 %v411, 16
        %v428 = vshrl.u32 %v412, 16
        %v429 = vshrl.u32 %v413, 16
        %v430 = vshrl.u32 %v414, 16
        %v431 = vshrl.u32 %v415, 16
        %v432 = vshrl.u32 %v416, 16
        %v433 = vshrl.u32 %v417, 16
        %v434 = vshrl.u32 %v418, 16
        %v435 = vshrl.u32 %v419, 16
        %v436 = vshrl.u32 %v420, 16
        %v437 = vshrl.u32 %v421, 16
        %v438 = vshrl.u32 %v422, 16
        %v439 = vshrl.u32 %v423, 16
        %v440 = vshrl.u32 %v424, 16
        %v441 = vshrl.u32 %v425, 16
        %v442 = vshrl.u32 %v426, 16
        %v443 = vxor.u32 %v411, %v427
        %v444 = vxor.u32 %v412, %v428
        %v445 = vxor.u32 %v413, %v429
        %v446 = vxor.u32 %v414, %v430
        %v447 = vxor.u32 %v415, %v431
        %v448 = vxor.u32 %v416, %v432
        %v449 = vxor.u32 %v417, %v433
        %v450 = vxor.u32 %v418, %v434
        %v451 = vxor.u32 %v419, %v435
        %v452 = vxor.u32 %v420, %v436
        %v453 = vxor.u32 %v421, %v437
        %v454 = vxor.u32 %v422, %v438
        %v455 = vxor.u32 %v423, %v439
        %v456 = vxor.u32 %v424, %v440
        %v457 = vxor.u32 %v425, %v441
        %v458 = vxor.u32 %v426, %v442
        %v459 = vmul.u32 %v443, 2246822507
        %v460 = vmul.u32 %v444, 2246822507
        %v461 = vmul.u32 %v445, 2246822507
        %v462 = vmul.u32 %v446, 2246822507
        %v463 = vmul.u32 %v447, 2246822507
        %v464 = vmul.u32 %v448, 2246822507
        %v465 = vmul.u32 %v449, 2246822507
        %v466 = vmul.u32 %v450, 2246822507
        %v467 = vmul.u32 %v451, 2246822507
        %v468 = vmul.u32 %v452, 2246822507
        %v469 = vmul.u32 %v453, 2246822507
        %v470 = vmul.u32 %v454, 2246822507
        %v471 = vmul.u32 %v455, 2246822507
        %v472 = vmul.u32 %v456, 2246822507
        %v473 = vmul.u32 %v457, 2246822507
        %v474 = vmul.u32 %v458, 2246822507
        %v475 = vshrl.u32 %v459, 13
        %v476 = vshrl.u32 %v460, 13
        %v477 = vshrl.u32 %v461, 13
        %v478 = vshrl.u32 %v462, 13
        %v479 = vshrl.u32 %v463, 13
        %v480 = vshrl.u32 %v464, 13
        %v481 = vshrl.u32 %v465, 13
        %v482 = vshrl.u32 %v466, 13
        %v483 = vshrl.u32 %v467, 13
        %v484 = vshrl.u32 %v468, 13
        %v485 = vshrl.u32 %v469, 13
        %v486 = vshrl.u32 %v470, 13
        %v487 = vshrl.u32 %v471, 13
        %v488 = vshrl.u32 %v472, 13
        %v489 = vshrl.u32 %v473, 13
        %v490 = vshrl.u32 %v474, 13
        %v491 = vxor.u32 %v459, %v475
        %v492 = vxor.u32 %v460, %v476
        %v493 = vxor.u32 %v461, %v477
        %v494 = vxor.u32 %v462, %v478
        %v495 = vxor.u32 %v463, %v479
        %v496 = vxor.u32 %v464, %v480
        %v497 = vxor.u32 %v465, %v481
        %v498 = vxor.u32 %v466, %v482
        %v499 = vxor.u32 %v467, %v483
        %v500 = vxor.u32 %v468, %v484
        %v501 = vxor.u32 %v469, %v485
        %v502 = vxor.u32 %v470, %v486
        %v503 = vxor.u32 %v471, %v487
        %v504 = vxor.u32 %v472, %v488
        %v505 = vxor.u32 %v473, %v489
        %v506 = vxor.u32 %v474, %v490
        %v507 = vmul.u32 %v491, 3266489909
        %v508 = vmul.u32 %v492, 3266489909
        %v509 = vmul.u32 %v493, 3266489909
        %v510 = vmul.u32 %v494, 3266489909
        %v511 = vmul.u32 %v495, 3266489909
        %v512 = vmul.u32 %v496, 3266489909
        %v513 = vmul.u32 %v497, 3266489909
        %v514 = vmul.u32 %v498, 3266489909
        %v515 = vmul.u32 %v499, 3266489909
        %v516 = vmul.u32 %v500, 3266489909
        %v517 = vmul.u32 %v501, 3266489909
        %v518 = vmul.u32 %v502, 3266489909
        %v519 = vmul.u32 %v503, 3266489909
        %v520 = vmul.u32 %v504, 3266489909
        %v521 = vmul.u32 %v505, 3266489909
        %v522 = vmul.u32 %v506, 3266489909
        %v523 = vshrl.u32 %v507, 16
        %v524 = vshrl.u32 %v508, 16
        %v525 = vshrl.u32 %v509, 16
        %v526 = vshrl.u32 %v510, 16
        %v527 = vshrl.u32 %v511, 16
        %v528 = vshrl.u32 %v512, 16
        %v529 = vshrl.u32 %v513, 16
        %v530 = vshrl.u32 %v514, 16
        %v531 = vshrl.u32 %v515, 16
        %v532 = vshrl.u32 %v516, 16
        %v533 = vshrl.u32 %v517, 16
        %v534 = vshrl.u32 %v518, 16
        %v535 = vshrl.u32 %v519, 16
        %v536 = vshrl.u32 %v520, 16
        %v537 = vshrl.u32 %v521, 16
        %v538 = vshrl.u32 %v522, 16
        %v539 = vxor.u32 %v507, %v523
        %v540 = vxor.u32 %v508, %v524
        %v541 = vxor.u32 %v509, %v525
        %v542 = vxor.u32 %v510, %v526
        %v543 = vxor.u32 %v511, %v527
        %v544 = vxor.u32 %v512, %v528
        %v545 = vxor.u32 %v513, %v529
        %v546 = vxor.u32 %v514, %v530
        %v547 = vxor.u32 %v515, %v531
        %v548 = vxor.u32 %v516, %v532
        %v549 = vxor.u32 %v517, %v533
        %v550 = vxor.u32 %v518, %v534
        %v551 = vxor.u32 %v519, %v535
        %v552 = vxor.u32 %v520, %v536
        %v553 = vxor.u32 %v521, %v537
        %v554 = vxor.u32 %v522, %v538
        %v555 = vadd.s32 %v539, 2147483648
        %vm557 = vcmp.lt.s32.totalorder %v555, 0
        %v558 = vadd.s32 %v540, 2147483648
        %vm560 = vcmp.lt.s32.totalorder %v558, 0
        %v561 = vadd.s32 %v541, 2147483648
        %vm563 = vcmp.lt.s32.totalorder %v561, 0
        %v564 = vadd.s32 %v542, 2147483648
        %vm566 = vcmp.lt.s32.totalorder %v564, 0
        %v567 = vadd.s32 %v543, 2147483648
        %vm569 = vcmp.lt.s32.totalorder %v567, 0
        %v570 = vadd.s32 %v544, 2147483648
        %vm572 = vcmp.lt.s32.totalorder %v570, 0
        %v573 = vadd.s32 %v545, 2147483648
        %vm575 = vcmp.lt.s32.totalorder %v573, 0
        %v576 = vadd.s32 %v546, 2147483648
        %vm578 = vcmp.lt.s32.totalorder %v576, 0
        %v579 = vadd.s32 %v547, 2147483648
        %vm581 = vcmp.lt.s32.totalorder %v579, 0
        %v582 = vadd.s32 %v548, 2147483648
        %vm584 = vcmp.lt.s32.totalorder %v582, 0
        %v585 = vadd.s32 %v549, 2147483648
        %vm587 = vcmp.lt.s32.totalorder %v585, 0
        %v588 = vadd.s32 %v550, 2147483648
        %vm590 = vcmp.lt.s32.totalorder %v588, 0
        %v591 = vadd.s32 %v551, 2147483648
        %vm593 = vcmp.lt.s32.totalorder %v591, 0
        %v594 = vadd.s32 %v552, 2147483648
        %vm596 = vcmp.lt.s32.totalorder %v594, 0
        %v597 = vadd.s32 %v553, 2147483648
        %vm599 = vcmp.lt.s32.totalorder %v597, 0
        %v600 = vadd.s32 %v554, 2147483648
        %vm602 = vcmp.lt.s32.totalorder %v600, 0
        %v603 = vmul.f32 %v292, 2.0
        %v604 = vmul.f32 %v295, 2.0
        %v605 = vmul.f32 %v298, 2.0
        %v606 = vmul.f32 %v301, 2.0
        %v607 = vmul.f32 %v304, 2.0
        %v608 = vmul.f32 %v307, 2.0
        %v609 = vmul.f32 %v310, 2.0
        %v610 = vmul.f32 %v313, 2.0
        %v611 = vmul.f32 %v316, 2.0
        %v612 = vmul.f32 %v319, 2.0
        %v613 = vmul.f32 %v322, 2.0
        %v614 = vmul.f32 %v325, 2.0
        %v615 = vmul.f32 %v328, 2.0
        %v616 = vmul.f32 %v331, 2.0
        %v617 = vmul.f32 %v334, 2.0
        %v618 = vmul.f32 %v337, 2.0
        %v619 = vsel %vm557, %v603, 0.0
        %v620 = vsel %vm560, %v604, 0.0
        %v621 = vsel %vm563, %v605, 0.0
        %v622 = vsel %vm566, %v606, 0.0
        %v623 = vsel %vm569, %v607, 0.0
        %v624 = vsel %vm572, %v608, 0.0
        %v625 = vsel %vm575, %v609, 0.0
        %v626 = vsel %vm578, %v610, 0.0
        %v627 = vsel %vm581, %v611, 0.0
        %v628 = vsel %vm584, %v612, 0.0
        %v629 = vsel %vm587, %v613, 0.0
        %v630 = vsel %vm590, %v614, 0.0
        %v631 = vsel %vm593, %v615, 0.0
        %v632 = vsel %vm596, %v616, 0.0
        %v633 = vsel %vm599, %v617, 0.0
        %v634 = vsel %vm602, %v618, 0.0
        %635 = vst [vmem:[%s235] sm:$0xff] %v619
        %636 = vst [vmem:[%s235 + $0x8] sm:$0xff] %v620
        %637 = vst [vmem:[%s235 + $0x10] sm:$0xff] %v621
        %638 = vst [vmem:[%s235 + $0x18] sm:$0xff] %v622
        %639 = vst [vmem:[%s235 + $0x20] sm:$0xff] %v623
        %640 = vst [vmem:[%s235 + $0x28] sm:$0xff] %v624
        %641 = vst [vmem:[%s235 + $0x30] sm:$0xff] %v625
        %642 = vst [vmem:[%s235 + $0x38] sm:$0xff] %v626
        %643 = vst [vmem:[%s235 + $0x40] sm:$0xff] %v627
        %644 = vst [vmem:[%s235 + $0x48] sm:$0xff] %v628
        %645 = vst [vmem:[%s235 + $0x50] sm:$0xff] %v629
        %646 = vst [vmem:[%s235 + $0x58] sm:$0xff] %v630
        %647 = vst [vmem:[%s235 + $0x60] sm:$0xff] %v631
        %648 = vst [vmem:[%s235 + $0x68] sm:$0xff] %v632
        %649 = vst [vmem:[%s235 + $0x70] sm:$0xff] %v633
        %650 = vst [vmem:[%s235 + $0x78] sm:$0xff] %v634
        %s651 = sand.u32 %s120, 1
        %s652 = scalar_lea.sflag [#allocation5], %s651
        %s653 = sand.u32 %s120, 1
        %s654 = smul.addr %s653, 128
        %s655 = scalar_lea.vmem [#allocation8], %s654
        // Predicated region
        $region45: #{dropout_wrap_forward.1} parent=35 // pred_check
          %p656 = pneg %p130
        $region46: #{dropout_wrap_forward.1} parent=35 // pred_check_branch
          %658 = sbr.rel (%p656) target = $region48
        $region47: #{dropout_wrap_forward.1} parent=35 // pred_region
          %s659 = smul.u32 16, %s23
          %661 = vsyncadd %s652, 0
          %s662 = smul.addr %s659, 8
          %s663 = scalar_lea.hbm %s4, %s662
          %s664 = sshll.u32 %s655, 4
          %s665 = int_to_ptr.vmem [resolvable:$true] %s664
          %s666 = sshll.u32 %s663, 4
          %s667 = int_to_ptr.hbm [resolvable:$true] %s666
          %672 = dma.vmem_to_hbm [thread:$0]  %s665, 2048, %s667, %s652, 128, 128, 8
        $region48: #{dropout_wrap_forward.1} parent=35 // pred_fallthru
          _
      $region36: #{dropout_wrap_forward.1} parent=5 // pred_fallthru
        _
      %p673 = scmp.le.s32.totalorder 2, %s18
      // Predicated region
      $region49: #{dropout_wrap_forward.1} parent=5 // pred_check
        %p674 = pneg %p673
      $region50: #{dropout_wrap_forward.1} parent=5 // pred_check_branch
        %676 = sbr.rel (%p674) target = $region52
      $region51: #{dropout_wrap_forward.1} parent=5 // pred_region
        %s677 = ssub.s32 %s18, 2
        // Predicated region
        $region53: #{dropout_wrap_forward.1} parent=51 // pred_check
          %p678 = pneg %p136
        $region54: #{dropout_wrap_forward.1} parent=51 // pred_check_branch
          %680 = sbr.rel (%p678) target = $region56
        $region55: #{dropout_wrap_forward.1} parent=51 // pred_region
          %s681 = sand.u32 %s121, 1
          %s682 = scalar_lea.sflag [#allocation5], %s681
          %s683 = sand.u32 %s121, 1
          %s684 = smul.addr %s683, 128
          %s685 = scalar_lea.vmem [#allocation8], %s684
          %687 = dma.done %s682, 2048
        $region56: #{dropout_wrap_forward.1} parent=51 // pred_fallthru
          _
      $region52: #{dropout_wrap_forward.1} parent=5 // pred_fallthru
        _
    $region6: #{dropout_wrap_forward.1} parent=1 // loop_footer
      %s22 = sadd.s32 1, %s18
    $region7: #{dropout_wrap_forward.1} parent=1 // loop_footer_branch
      %17 = sbr.rel target = $region3
    $region8: #{dropout_wrap_forward.1} parent=1 // loop_exit
      _
    %688 = vsyncpa [#allocation4], 1
    %s689 = scalar_lea.sflag [#allocation4], 1
    %690 = vsyncpa %s689, 1
    %691 = vsyncpa [#allocation7], 1
    %692 = vsyncpa [#allocation5], 1
    %s693 = scalar_lea.sflag [#allocation5], 1
    %694 = vsyncpa %s693, 1

</llo_original>
